<compile_context>
chip_gen: v5e
topology: v5e:2x2
jax: 0.10.0
libtpu: 0.0.40
codegen_flags: <defaults>
</compile_context>

<pallas_src>
import jax
import jax.numpy as jnp
from jax.experimental import pallas as pl
from jax.experimental.pallas import tpu as pltpu


_VMEM_BUDGET_BYTES = 24 * 1024 * 1024   # target double-buffered working set
_VMEM_LIMIT_BYTES = 32 * 1024 * 1024    # scoped-VMEM limit (safe on v5e/v6e/v7x)


def _pos_enc_kernel_3d(x_ref, pe_ref, o_ref):
    # x_ref: (1, TS, D), pe_ref: (TS, D) -> broadcast over the leading batch dim.
    o_ref[...] = x_ref[...] + pe_ref[...]


def _pos_enc_kernel_flat(x_ref, pe_ref, o_ref):
    # x_ref: (B, TC), pe_ref: (1, TC) -> broadcast over rows (batch).
    o_ref[...] = x_ref[...] + pe_ref[...]


def _sublane(itemsize: int) -> int:
    # Packed-sublane multiple per dtype width (f32: 8, bf16: 16, int8/fp8: 32).
    return {4: 8, 2: 16, 1: 32}.get(itemsize, 8)


def _pick_seq_tile(S: int, D: int, itemsize: int) -> int:
    """Largest sublane-aligned divisor of S whose tiles fit the VMEM budget."""
    sub = _sublane(itemsize)
    per_row = 6 * D * itemsize          # x, out, pe tiles, each double-buffered
    max_rows = max(sub, _VMEM_BUDGET_BYTES // per_row)
    if S <= max_rows:
        return S
    t = (max_rows // sub) * sub
    while t >= sub:
        if S % t == 0:
            return t
        t -= sub
    return S   # no clean divisor: fall back to the full (untiled) seq dim


def _pick_flat_tile(total: int, B: int, itemsize: int) -> int:
    per_col = (4 * B + 2) * itemsize    # x/out (B rows, double-buffered) + pe row
    max_cols = max(128, _VMEM_BUDGET_BYTES // per_col)
    if total <= max_cols:
        return total
    t = (max_cols // 128) * 128
    while t >= 128:
        if total % t == 0:
            return t
        t -= 128
    return total


def positional_encoding_batched(x: jax.Array, emb_weight: jax.Array) -> jax.Array:
    """x: [B, S, D], emb_weight: [num_positions, D] -> x + emb_weight[:S] (broadcast over B)."""
    B, S, D = x.shape
    num_positions, _ = emb_weight.shape
    assert S <= num_positions, "sequence length exceeds num_positions"
    emb_weight = emb_weight.astype(x.dtype)
    itemsize = jnp.dtype(x.dtype).itemsize

    cost = pl.CostEstimate(
        flops=B * S * D,
        transcendentals=0,
        bytes_accessed=(2 * B * S * D + S * D) * itemsize,
    )

    # ---- Lane-dense path for small / non-128-multiple D ---------------------
    if D % 128 != 0 and (S * D) % 128 == 0:
        total = S * D
        tile_c = _pick_flat_tile(total, B, itemsize)
        x_flat = x.reshape(B, total)
        # Tiny slice (needed to flatten); cost is S*D, negligible in this regime.
        pe_flat = emb_weight[:S, :].reshape(1, total)
        out_flat = pl.pallas_call(
            _pos_enc_kernel_flat,
            out_shape=jax.ShapeDtypeStruct((B, total), x.dtype),
            grid_spec=pltpu.PrefetchScalarGridSpec(
                num_scalar_prefetch=0,
                grid=(total // tile_c,),
                in_specs=[
                    pl.BlockSpec((B, tile_c), lambda c: (0, c)),
                    pl.BlockSpec((1, tile_c), lambda c: (0, c)),
                ],
                out_specs=pl.BlockSpec((B, tile_c), lambda c: (0, c)),
            ),
            compiler_params=pltpu.CompilerParams(
                dimension_semantics=("parallel",),
                vmem_limit_bytes=_VMEM_LIMIT_BYTES,
            ),
            cost_estimate=cost,
        )(x_flat, pe_flat)
        return out_flat.reshape(B, S, D)

    # ---- General path: grid = (seq_tiles, batch); PE tile DMA'd once per tile
    tile_s = _pick_seq_tile(S, D, itemsize)
    sub = _sublane(itemsize)

    # Select PE rows straight from the full table via the index_map when the
    # block shape is legal against it; otherwise fall back to a wrapper slice
    # so the block dim equals the full array dim.
    if tile_s % sub == 0 or tile_s == num_positions:
        pe_operand = emb_weight
    else:
        pe_operand = emb_weight[:S, :]

    return pl.pallas_call(
        _pos_enc_kernel_3d,
        out_shape=jax.ShapeDtypeStruct((B, S, D), x.dtype),
        grid_spec=pltpu.PrefetchScalarGridSpec(
            num_scalar_prefetch=0,
            grid=(S // tile_s, B),                           # seq OUTER, batch INNER
            in_specs=[
                pl.BlockSpec((1, tile_s, D), lambda s, b: (b, s, 0)),
                pl.BlockSpec((tile_s, D), lambda s, b: (s, 0)),  # constant over batch
            ],
            out_specs=pl.BlockSpec((1, tile_s, D), lambda s, b: (b, s, 0)),
        ),
        compiler_params=pltpu.CompilerParams(
            dimension_semantics=("parallel", "parallel"),    # v7x: 2 TCs split grid
            vmem_limit_bytes=_VMEM_LIMIT_BYTES,
        ),
        cost_estimate=cost,
    )(x, pe_operand)


if __name__ == "__main__":
    k1, k2, k3, k4 = jax.random.split(jax.random.PRNGKey(0), 4)

    # Case 1: module-consistent small shapes (D=32 -> lane-dense flattened path).
    d_model, num_positions, batch, seq_len = 32, 20, 2, 8
    emb1 = jax.random.normal(k1, (num_positions, d_model), dtype=jnp.float32)
    x1 = jax.random.normal(k2, (batch, seq_len, d_model), dtype=jnp.float32)
    out1 = jax.block_until_ready(positional_encoding_batched(x1, emb1))
    ref1 = x1 + emb1[:seq_len, :][None, :, :]
    assert out1.shape == x1.shape
    assert jnp.allclose(out1, ref1, atol=1e-6, rtol=1e-6)

    # Case 2: D=128 exercises the general tiled path (full-table PE BlockSpec).
    emb2 = jax.random.normal(k3, (20, 128), dtype=jnp.float32)
    x2 = jax.random.normal(k4, (2, 16, 128), dtype=jnp.float32)
    out2 = jax.block_until_ready(positional_encoding_batched(x2, emb2))
    ref2 = x2 + emb2[:16, :][None, :, :]
    assert out2.shape == x2.shape
    assert jnp.allclose(out2, ref2, atol=1e-6, rtol=1e-6)

    print("KERNEL_OK")
</pallas_src>

<mosaic_0001>
module attributes {stable_mosaic.version = 11 : i64} {
  func.func @_pos_enc_kernel_flat(%arg0: i32, %arg1: memref<2x256xf32, #tpu.memory_space<vmem>>, %arg2: memref<1x256xf32, #tpu.memory_space<vmem>>, %arg3: memref<2x256xf32, #tpu.memory_space<vmem>>) attributes {dimension_semantics = [#tpu.dimension_semantics<parallel>], iteration_bounds = array<i64: 1>, scalar_prefetch = 0 : i64, scratch_operands = 0 : i64, tpu.core_type = #tpu.core_type<tc>, window_params = [{transform_indices = @transform_0, window_bounds = array<i64: 2, 256>}, {transform_indices = @transform_1, window_bounds = array<i64: 1, 256>}, {transform_indices = @transform_2, window_bounds = array<i64: 2, 256>}]} {
    %c0 = arith.constant 0 : index
    %c0_0 = arith.constant 0 : index
    %0 = vector.load %arg1[%c0, %c0_0] : memref<2x256xf32, #tpu.memory_space<vmem>>, vector<2x256xf32>
    %c0_1 = arith.constant 0 : index
    %c0_2 = arith.constant 0 : index
    %1 = vector.load %arg2[%c0_1, %c0_2] : memref<1x256xf32, #tpu.memory_space<vmem>>, vector<1x256xf32>
    %2 = vector.broadcast %1 : vector<1x256xf32> to vector<2x256xf32>
    %3 = arith.addf %0, %2 : vector<2x256xf32>
    %c0_3 = arith.constant 0 : index
    %c0_4 = arith.constant 0 : index
    %4 = vector.load %arg3[%c0_3, %c0_4] : memref<2x256xf32, #tpu.memory_space<vmem>>, vector<2x256xf32>
    tpu.vector_store %arg3[%c0_3, %c0_4], %3 {strides = array<i32>} : memref<2x256xf32, #tpu.memory_space<vmem>>, vector<2x256xf32>,
    return
  }
  func.func @transform_0(%arg0: i32) -> (i32, i32) {
    %c0_i32 = arith.constant 0 : i32
    %c0_i32_0 = arith.constant 0 : i32
    return %c0_i32, %arg0 : i32, i32
  }
  func.func @transform_1(%arg0: i32) -> (i32, i32) {
    %c0_i32 = arith.constant 0 : i32
    %c0_i32_0 = arith.constant 0 : i32
    return %c0_i32, %arg0 : i32, i32
  }
  func.func @transform_2(%arg0: i32) -> (i32, i32) {
    %c0_i32 = arith.constant 0 : i32
    %c0_i32_0 = arith.constant 0 : i32
    return %c0_i32, %arg0 : i32, i32
  }
}

</mosaic_0001>

<llo_original>
// kernel: tpu_custom_call.1
$region0: #{tpu_custom_call.1}
  #allocation0 [shape = 'u32[]', space=smem, size = 0x4, offset = 0x4, fixed_abs, tag = 'smem constant byte address 0x4 - core index']
  #allocation1 [shape = 'u32[72,128]{1,0:T(1,128)}', space=vmem, size = 0x9000, scoped, tag = 'internal scratch']
  %s0 = inlined_call_operand.hbm [shape: f32[2,256], index: 0, kind: input, shape index: {}]
  %s1 = inlined_call_operand.hbm [shape: f32[1,256], index: 1, kind: input, shape index: {}]
  %s2 = inlined_call_operand.hbm [shape: f32[2,256], index: 2, kind: output, shape index: {}]
  %s3 = sld [smem:[#allocation0]]
  $region26: #{tpu_custom_call.1} parent=0
    _
  %s5 = ssub.s32 1, %s3
  %s6 = scalar_select 0, %s5, %s3
  $region1: #{tpu_custom_call.1} parent=0
    #allocation2 [shape = 'u8[2048]{0}', space=vmem, size = 0x800, scoped, tag = 'input window, operand 0, single buffered']
    #allocation3 [shape = 's32[1]{0}', space=sflag, size = 0x4, scoped, tag = 'scoped memory for tpu_custom_call.1']
    #allocation4 [shape = 's32[1]{0}', space=sflag, size = 0x4, scoped, tag = 'scoped memory for tpu_custom_call.1']
    #allocation5 [shape = 'u8[1024]{0}', space=vmem, size = 0x400, scoped, tag = 'input window, operand 1, single buffered']
    #allocation6 [shape = 's32[1]{0}', space=sflag, size = 0x4, scoped, tag = 'scoped memory for tpu_custom_call.1']
    #allocation7 [shape = 'u8[2048]{0}', space=vmem, size = 0x800, scoped, tag = 'output window, operand 0, single buffered']
    %7 = vsyncpa [#allocation3], 0
    %8 = vsyncpa [#allocation6], 0
    %9 = vsyncpa [#allocation4], 0
    // Predicated region
    $region2: #{tpu_custom_call.1} parent=1 // pred_check
      _
    $region3: #{tpu_custom_call.1} parent=1 // pred_check_branch
      %11 = sbr.rel (0) target = $region5
    $region4: #{tpu_custom_call.1} parent=1 // pred_region
      %13 = vsyncadd [#allocation3], 0
      %s15 = sshll.u32 %s0, 4
      %s16 = int_to_ptr.hbm [resolvable:$true] %s15
      %s17 = sshll.u32 [#allocation2], 4
      %s18 = int_to_ptr.vmem [resolvable:$true] %s17
      %20 = dma.hbm_to_vmem [thread:$0]  %s16, 64, %s18, [#allocation3]
    $region5: #{tpu_custom_call.1} parent=1 // pred_fallthru
      _
    // Predicated region
    $region6: #{tpu_custom_call.1} parent=1 // pred_check
      _
    $region7: #{tpu_custom_call.1} parent=1 // pred_check_branch
      %22 = sbr.rel (0) target = $region9
    $region8: #{tpu_custom_call.1} parent=1 // pred_region
      %24 = vsyncadd [#allocation6], 0
      %s26 = sshll.u32 %s1, 4
      %s27 = int_to_ptr.hbm [resolvable:$true] %s26
      %s28 = sshll.u32 [#allocation5], 4
      %s29 = int_to_ptr.vmem [resolvable:$true] %s28
      %31 = dma.hbm_to_vmem [thread:$0]  %s27, 32, %s29, [#allocation6]
    $region9: #{tpu_custom_call.1} parent=1 // pred_fallthru
      _
    // Predicated region
    $region10: #{tpu_custom_call.1} parent=1 // pred_check
      _
    $region11: #{tpu_custom_call.1} parent=1 // pred_check_branch
      %33 = sbr.rel (0) target = $region13
    $region12: #{tpu_custom_call.1} parent=1 // pred_region
      %35 = dma.done [#allocation3], 64
    $region13: #{tpu_custom_call.1} parent=1 // pred_fallthru
      _
    // Predicated region
    $region14: #{tpu_custom_call.1} parent=1 // pred_check
      _
    $region15: #{tpu_custom_call.1} parent=1 // pred_check_branch
      %37 = sbr.rel (0) target = $region17
    $region16: #{tpu_custom_call.1} parent=1 // pred_region
      %39 = dma.done [#allocation6], 32
    $region17: #{tpu_custom_call.1} parent=1 // pred_fallthru
      _
    %v40 = vld [vmem:[#allocation2] sm:$0xf]
    %v41 = vld [vmem:[#allocation5] sm:$0x3]
    %v43 = vperm.slane %v41, 0
    %v44 = vperm.slane %v41, 1
    %v45 = vrot.slane %v44, 6
    %vm46 = vcmask 1041408
    %v47 = vsel %vm46, %v43, %v45
    %v49 = vadd.f32 %v40, %v47
    %50 = vst [vmem:[#allocation7] sm:$0xf] %v49
    // Predicated region
    $region18: #{tpu_custom_call.1} parent=1 // pred_check
      _
    $region19: #{tpu_custom_call.1} parent=1 // pred_check_branch
      %52 = sbr.rel (0) target = $region21
    $region20: #{tpu_custom_call.1} parent=1 // pred_region
      %54 = vsyncadd [#allocation4], 0
      %s56 = sshll.u32 [#allocation7], 4
      %s57 = int_to_ptr.vmem [resolvable:$true] %s56
      %s58 = sshll.u32 %s2, 4
      %s59 = int_to_ptr.hbm [resolvable:$true] %s58
      %61 = dma.vmem_to_hbm [thread:$0]  %s57, 64, %s59, [#allocation4]
    $region21: #{tpu_custom_call.1} parent=1 // pred_fallthru
      _
    // Predicated region
    $region22: #{tpu_custom_call.1} parent=1 // pred_check
      _
    $region23: #{tpu_custom_call.1} parent=1 // pred_check_branch
      %63 = sbr.rel (0) target = $region25
    $region24: #{tpu_custom_call.1} parent=1 // pred_region
      %65 = dma.done [#allocation4], 64
    $region25: #{tpu_custom_call.1} parent=1 // pred_fallthru
      _
    %66 = vsyncpa [#allocation3], 1
    %67 = vsyncpa [#allocation6], 1
    %68 = vsyncpa [#allocation4], 1

</llo_original>
